<compile_context>
chip_gen: v7x
topology: tpu7x:2x2x1
jax: 0.10.0
libtpu: 0.0.40
codegen_flags: <defaults>
</compile_context>

<pallas_src>
import jax
import jax.numpy as jnp
from jax.experimental import pallas as pl
from jax.experimental.pallas import tpu as pltpu


def _round_up(x, m):
    return ((x + m - 1) // m) * m


def _vmem_estimate(tb, S, H, tv):
    """Rough double-buffered VMEM working set in bytes for one grid step."""
    bf, f32 = 2, 4
    hidden = 2 * tb * S * H * bf
    w = 2 * H * tv * bf
    bias = 2 * tv * f32
    mask = 2 * tb * S * 128 * bf
    logits_out = 2 * tb * S * tv * bf
    values_out = 2 * tb * 1 * tv * f32
    interm = 2 * tb * S * tv * f32          # f32 logits + masked intermediate
    return hidden + w + bias + mask + logits_out + values_out + interm


def _splade_kernel(h_ref, w_ref, b_ref, mask_ref, logits_ref, values_ref):
    # h_ref     : (tb, S, H)   bf16   (resident across the vocab-tile loop)
    # w_ref     : (H, tv)      bf16   (streamed once per vocab tile)
    # b_ref     : (1, tv)      f32
    # mask_ref  : (tb, S, 128) bf16   additive mask, 0 / -1e30 (resident per batch tile)
    # logits_ref: (tb, S, tv)  bf16 out
    # values_ref: (tb, 1, tv)  f32  out
    tb, S, H = h_ref.shape
    tv = w_ref.shape[1]

    # Fold batch into the MXU M dim: one (tb*S, H) x (H, tv) matmul amortizes the
    # W tile across tb batch rows and fills the systolic array better.
    h2 = h_ref[...].reshape(tb * S, H)
    logits = jnp.dot(h2, w_ref[...], preferred_element_type=jnp.float32)   # (tb*S, tv) f32
    logits = logits.reshape(tb, S, tv) + b_ref[...]                        # (tb, S, tv) f32
    logits_ref[...] = logits.astype(logits_ref.dtype)

    # Hoisted SPLADE reduction: additive mask, max over seq, then a single
    # log1p(relu(.)) per (batch, vocab) element (S-fold fewer EUP ops).
    masked = logits + mask_ref[:, :, 0:1].astype(jnp.float32)              # (tb, S, tv)
    m = jnp.max(masked, axis=1, keepdims=True)                             # (tb, 1, tv)
    values_ref[...] = jnp.log1p(jnp.maximum(m, 0.0))


def splade_head(hidden, w_out, b_out, attention_mask, *, tv=512, tb=None,
                compute_dtype=jnp.bfloat16, logits_dtype=jnp.bfloat16,
                vmem_cap_bytes=48 * 1024 * 1024):
    """Fused vocab projection + SPLADE max-over-seq reduction.

    Returns (values (B, V) f32, logits (B, S, V) logits_dtype).
    """
    B, S, H = hidden.shape
    V = w_out.shape[1]

    # Vocab tile: multiple of 256 (v6e/v7x MXU N dim); pad V instead of asserting.
    v256 = _round_up(V, 256)
    tv = max(256, min(_round_up(tv, 256), v256))

    # Batch tile: fold several batch rows into one matmul; must divide B.
    if tb is None:
        tb = min(B, 8)
    tb = max(1, min(tb, B))
    while B % tb != 0:
        tb -= 1

    # Shrink tiles until the double-buffered working set fits the VMEM cap
    # (v7x has only 64 MiB physical VMEM; 48 MiB default leaves headroom everywhere).
    while _vmem_estimate(tb, S, H, tv) > int(0.75 * vmem_cap_bytes):
        if tv > 256:
            tv = max(256, ((tv // 2) // 256) * 256)
        elif tb > 1:
            tb = max(1, tb // 2)
            while B % tb != 0:
                tb -= 1
        else:
            break

    V_pad = _round_up(V, tv)

    h = hidden.astype(compute_dtype)
    w = w_out.astype(compute_dtype)
    bias = b_out.astype(jnp.float32)
    if V_pad != V:
        # Zero-padded columns give logits == 0 -> values == 0; sliced off below.
        w = jnp.pad(w, ((0, 0), (0, V_pad - V)))
        bias = jnp.pad(bias, (0, V_pad - V))
    bias2 = bias.reshape(1, V_pad)

    # Lane-dense bf16 additive mask slab (0 valid / -1e30 masked); kernel reads col 0.
    addmask = jnp.where(attention_mask > 0, 0.0, -1e30).astype(compute_dtype)   # (B, S)
    mask_b = jnp.broadcast_to(addmask[:, :, None], (B, S, 128))

    logits, values3 = pl.pallas_call(
        _splade_kernel,
        out_shape=(
            jax.ShapeDtypeStruct((B, S, V_pad), logits_dtype),
            jax.ShapeDtypeStruct((B, 1, V_pad), jnp.float32),
        ),
        grid_spec=pltpu.PrefetchScalarGridSpec(
            num_scalar_prefetch=0,
            grid=(B // tb, V_pad // tv),
            in_specs=[
                # hidden: constant in vi -> DMA'd once per batch tile, VMEM-resident.
                pl.BlockSpec((tb, S, H), lambda bi, vi: (bi, 0, 0)),
                # W_out: streamed once per (batch tile, vocab tile).
                # (If DMA shows exposed, deepen with pipeline_mode=pl.Buffered(3).)
                pl.BlockSpec((H, tv), lambda bi, vi: (0, vi)),
                # bias.
                pl.BlockSpec((1, tv), lambda bi, vi: (0, vi)),
                # additive mask: constant in vi -> resident per batch tile.
                pl.BlockSpec((tb, S, 128), lambda bi, vi: (bi, 0, 0)),
            ],
            out_specs=[
                pl.BlockSpec((tb, S, tv), lambda bi, vi: (bi, 0, vi)),   # logits (bf16)
                pl.BlockSpec((tb, 1, tv), lambda bi, vi: (bi, 0, vi)),   # values (f32)
            ],
        ),
        compiler_params=pltpu.CompilerParams(
            # No cross-grid accumulator: both axes independent -> megacore-friendly.
            dimension_semantics=("parallel", "parallel"),
            vmem_limit_bytes=int(vmem_cap_bytes),
        ),
    )(h, w, bias2, mask_b)

    values = values3.reshape(B, V_pad)
    if V_pad != V:
        values = values[:, :V]
        logits = logits[:, :, :V]
    return values, logits


def init_params(key, vocab_size, hidden_size):
    """Deterministic synthetic 'transformer with MLM head' parameters."""
    k0, k1, k2, k3, k4 = jax.random.split(key, 5)
    s = 0.02
    return {
        "embedding": s * jax.random.normal(k0, (vocab_size, hidden_size), jnp.float32),
        "w1": s * jax.random.normal(k1, (hidden_size, hidden_size), jnp.float32),
        "b1": s * jax.random.normal(k2, (hidden_size,), jnp.float32),
        "w_out": s * jax.random.normal(k3, (hidden_size, vocab_size), jnp.float32),
        "b_out": s * jax.random.normal(k4, (vocab_size,), jnp.float32),
    }


def memory_efficient_splade_forward(params, input_ids, attention_mask, top_k=64):
    # tiny synthetic transformer body (glue, plain JAX): embed -> dense+gelu
    h = params["embedding"][input_ids]                     # (B, S, H)
    h = jax.nn.gelu(h @ params["w1"] + params["b1"])       # (B, S, H)

    # hot path in Pallas: logits projection + SPLADE sparse activation
    values, logits = splade_head(h, params["w_out"], params["b_out"], attention_mask)

    # top-k thresholding (matches: values * (values >= threshold))
    # TODO(synk): top_k has no clean in-kernel Pallas equivalent; done with lax.top_k.
    top_values = jax.lax.top_k(values, top_k)[0]
    threshold = top_values[..., -1:]
    values = values * (values >= threshold).astype(values.dtype)
    return values, logits


def _reference_forward(params, input_ids, attention_mask, top_k=64):
    # Mirrors the kernel's bf16-input / f32-accumulate matmul so the comparison
    # is not dominated by the (intentional) bf16 quantization of the operands.
    h = params["embedding"][input_ids]
    h = jax.nn.gelu(h @ params["w1"] + params["b1"])
    logits = jnp.dot(h.astype(jnp.bfloat16),
                     params["w_out"].astype(jnp.bfloat16),
                     preferred_element_type=jnp.float32) + params["b_out"]
    act = jnp.log1p(jnp.maximum(logits, 0.0)) * attention_mask.astype(jnp.float32)[..., None]
    values = jnp.max(act, axis=1)
    top_values = jax.lax.top_k(values, top_k)[0]
    threshold = top_values[..., -1:]
    values = values * (values >= threshold).astype(values.dtype)
    return values, logits


if __name__ == "__main__":
    B, S, H, V = 2, 16, 32, 256
    TOP_K = 64

    key = jax.random.PRNGKey(0)
    kp, ki = jax.random.split(key)
    params = init_params(kp, V, H)

    input_ids = jax.random.randint(ki, (B, S), 0, V, dtype=jnp.int32)
    attention_mask = jnp.ones((B, S), jnp.int32).at[1, 10:].set(0)

    values, logits = memory_efficient_splade_forward(params, input_ids, attention_mask, TOP_K)
    values = jax.block_until_ready(values)
    logits = jax.block_until_ready(logits)

    ref_values, ref_logits = _reference_forward(params, input_ids, attention_mask, TOP_K)
    assert values.shape == (B, V) and logits.shape == (B, S, V)
    # logits are stored in bf16 by the kernel -> compare with bf16-level tolerance.
    assert jnp.allclose(logits.astype(jnp.float32), ref_logits, atol=2e-3, rtol=1e-2)
    # values are computed/accumulated in f32 inside the kernel.
    assert jnp.allclose(values, ref_values, atol=2e-3, rtol=1e-2)

    print("KERNEL_OK")
</pallas_src>

<mosaic_0001>
module attributes {stable_mosaic.version = 11 : i64} {
  func.func @_splade_kernel(%arg0: i32, %arg1: i32, %arg2: memref<2x16x32xbf16, #tpu.memory_space<vmem>>, %arg3: memref<32x256xbf16, #tpu.memory_space<vmem>>, %arg4: memref<1x256xf32, #tpu.memory_space<vmem>>, %arg5: memref<2x16x128xbf16, #tpu.memory_space<vmem>>, %arg6: memref<2x16x256xbf16, #tpu.memory_space<vmem>>, %arg7: memref<2x1x256xf32, #tpu.memory_space<vmem>>) attributes {dimension_semantics = [#tpu.dimension_semantics<parallel>, #tpu.dimension_semantics<parallel>], iteration_bounds = array<i64: 1, 1>, scalar_prefetch = 0 : i64, scratch_operands = 0 : i64, tpu.core_type = #tpu.core_type<tc>, window_params = [{transform_indices = @transform_0, window_bounds = array<i64: 2, 16, 32>}, {transform_indices = @transform_1, window_bounds = array<i64: 32, 256>}, {transform_indices = @transform_2, window_bounds = array<i64: 1, 256>}, {transform_indices = @transform_3, window_bounds = array<i64: 2, 16, 128>}, {transform_indices = @transform_4, window_bounds = array<i64: 2, 16, 256>}, {transform_indices = @transform_5, window_bounds = array<i64: 2, 1, 256>}]} {
    %c0 = arith.constant 0 : index
    %c0_0 = arith.constant 0 : index
    %c0_1 = arith.constant 0 : index
    %0 = vector.load %arg2[%c0, %c0_0, %c0_1] : memref<2x16x32xbf16, #tpu.memory_space<vmem>>, vector<2x16x32xbf16>
    %1 = vector.shape_cast %0 : vector<2x16x32xbf16> to vector<32x32xbf16>
    %c0_2 = arith.constant 0 : index
    %c0_3 = arith.constant 0 : index
    %2 = vector.load %arg3[%c0_2, %c0_3] : memref<32x256xbf16, #tpu.memory_space<vmem>>, vector<32x256xbf16>
    %cst = arith.constant dense<0.000000e+00> : vector<32x256xf32>
    %3 = tpu.matmul %1, %2, %cst {dimension_numbers = #tpu.dot_dimension_numbers<[1], [0], [0], [1], [0, 0, 1, 1], [], []>} : vector<32x32xbf16>, vector<32x256xbf16>, vector<32x256xf32> -> vector<32x256xf32>
    %4 = vector.shape_cast %3 : vector<32x256xf32> to vector<2x16x256xf32>
    %c0_4 = arith.constant 0 : index
    %c0_5 = arith.constant 0 : index
    %5 = vector.load %arg4[%c0_4, %c0_5] : memref<1x256xf32, #tpu.memory_space<vmem>>, vector<1x256xf32>
    %6 = vector.shape_cast %5 : vector<1x256xf32> to vector<1x1x256xf32>
    %7 = vector.broadcast %6 : vector<1x1x256xf32> to vector<2x16x256xf32>
    %8 = arith.addf %4, %7 : vector<2x16x256xf32>
    %9 = arith.truncf %8 : vector<2x16x256xf32> to vector<2x16x256xbf16>
    %c0_6 = arith.constant 0 : index
    %c0_7 = arith.constant 0 : index
    %c0_8 = arith.constant 0 : index
    %10 = vector.load %arg6[%c0_6, %c0_7, %c0_8] : memref<2x16x256xbf16, #tpu.memory_space<vmem>>, vector<2x16x256xbf16>
    tpu.vector_store %arg6[%c0_6, %c0_7, %c0_8], %9 {strides = array<i32>} : memref<2x16x256xbf16, #tpu.memory_space<vmem>>, vector<2x16x256xbf16>,
    %c0_9 = arith.constant 0 : index
    %c0_10 = arith.constant 0 : index
    %c0_11 = arith.constant 0 : index
    %11 = vector.load %arg5[%c0_9, %c0_10, %c0_11] : memref<2x16x128xbf16, #tpu.memory_space<vmem>>, vector<2x16x1xbf16>
    %12 = arith.extf %11 : vector<2x16x1xbf16> to vector<2x16x1xf32>
    %13 = vector.broadcast %12 : vector<2x16x1xf32> to vector<2x16x256xf32>
    %14 = arith.addf %8, %13 : vector<2x16x256xf32>
    %cst_12 = arith.constant dense<0xFF800000> : vector<2x256xf32>
    %15 = vector.multi_reduction <maximumf>, %14, %cst_12 [1] : vector<2x16x256xf32> to vector<2x256xf32>
    %16 = vector.shape_cast %15 : vector<2x256xf32> to vector<2x1x256xf32>
    %cst_13 = arith.constant 0.000000e+00 : f32
    %17 = vector.broadcast %cst_13 : f32 to vector<2x1x256xf32>
    %18 = arith.maximumf %16, %17 : vector<2x1x256xf32>
    %19 = math.log1p %18 : vector<2x1x256xf32>
    %c0_14 = arith.constant 0 : index
    %c0_15 = arith.constant 0 : index
    %c0_16 = arith.constant 0 : index
    %20 = vector.load %arg7[%c0_14, %c0_15, %c0_16] : memref<2x1x256xf32, #tpu.memory_space<vmem>>, vector<2x1x256xf32>
    tpu.vector_store %arg7[%c0_14, %c0_15, %c0_16], %19 {strides = array<i32>} : memref<2x1x256xf32, #tpu.memory_space<vmem>>, vector<2x1x256xf32>,
    return
  }
  func.func @transform_0(%arg0: i32, %arg1: i32) -> (i32, i32, i32) {
    %c0_i32 = arith.constant 0 : i32
    %c0_i32_0 = arith.constant 0 : i32
    %c0_i32_1 = arith.constant 0 : i32
    return %arg0, %c0_i32, %c0_i32_0 : i32, i32, i32
  }
  func.func @transform_1(%arg0: i32, %arg1: i32) -> (i32, i32) {
    %c0_i32 = arith.constant 0 : i32
    %c0_i32_0 = arith.constant 0 : i32
    return %c0_i32, %arg1 : i32, i32
  }
  func.func @transform_2(%arg0: i32, %arg1: i32) -> (i32, i32) {
    %c0_i32 = arith.constant 0 : i32
    %c0_i32_0 = arith.constant 0 : i32
    return %c0_i32, %arg1 : i32, i32
  }
  func.func @transform_3(%arg0: i32, %arg1: i32) -> (i32, i32, i32) {
    %c0_i32 = arith.constant 0 : i32
    %c0_i32_0 = arith.constant 0 : i32
    %c0_i32_1 = arith.constant 0 : i32
    return %arg0, %c0_i32, %c0_i32_0 : i32, i32, i32
  }
  func.func @transform_4(%arg0: i32, %arg1: i32) -> (i32, i32, i32) {
    %c0_i32 = arith.constant 0 : i32
    %c0_i32_0 = arith.constant 0 : i32
    return %arg0, %c0_i32, %arg1 : i32, i32, i32
  }
  func.func @transform_5(%arg0: i32, %arg1: i32) -> (i32, i32, i32) {
    %c0_i32 = arith.constant 0 : i32
    %c0_i32_0 = arith.constant 0 : i32
    return %arg0, %c0_i32, %arg1 : i32, i32, i32
  }
}

</mosaic_0001>

<llo_original>
// kernel: tpu_custom_call.1
$region0: #{tpu_custom_call.1}
  #allocation0 [shape = 'u32[]', space=smem, size = 0x4, offset = 0x4, fixed_abs, tag = 'smem constant byte address 0x4 - core index']
  #allocation1 [shape = 'u32[144,128]{1,0:T(1,128)}', space=vmem, size = 0x12000, scoped, tag = 'internal scratch']
  %s0 = inlined_call_operand.hbm [shape: bf16[2,16,32], index: 0, kind: input, shape index: {}]
  %s1 = inlined_call_operand.hbm [shape: bf16[32,256], index: 1, kind: input, shape index: {}]
  %s2 = inlined_call_operand.vmem [shape: f32[1,256], index: 2, kind: input, shape index: {}]
  %s3 = inlined_call_operand.hbm [shape: bf16[2,16,128], index: 3, kind: input, shape index: {}]
  %s4 = inlined_call_operand.hbm [shape: bf16[2,16,256], index: 4, kind: output, shape index: {0}]
  %s5 = inlined_call_operand.hbm [shape: f32[2,1,256], index: 5, kind: output, shape index: {1}]
  %6 = xla_tuple %s4, %s5
  %s7 = sld [smem:[#allocation0]]
  $region46: #{tpu_custom_call.1} parent=0
    _
  %s9 = ssub.s32 1, %s7
  %s10 = scalar_select 0, %s9, %s7
  $region1: #{tpu_custom_call.1} parent=0
    #allocation2 [shape = 'u8[8192]{0}', space=vmem, size = 0x2000, scoped, tag = 'input window, operand 0, single buffered']
    #allocation3 [shape = 's32[1]{0}', space=sflag, size = 0x4, scoped, tag = 'scoped memory for tpu_custom_call.1']
    #allocation4 [shape = 's32[1]{0}', space=sflag, size = 0x4, scoped, tag = 'scoped memory for tpu_custom_call.1']
    #allocation5 [shape = 'u8[16384]{0}', space=vmem, size = 0x4000, scoped, tag = 'input window, operand 1, single buffered']
    #allocation6 [shape = 's32[1]{0}', space=sflag, size = 0x4, scoped, tag = 'scoped memory for tpu_custom_call.1']
    #allocation7 [shape = 'u8[8192]{0}', space=vmem, size = 0x2000, scoped, tag = 'input window, operand 3, single buffered']
    #allocation8 [shape = 'u8[16384]{0}', space=vmem, size = 0x4000, scoped, tag = 'output window, operand 0, single buffered']
    #allocation9 [shape = 'u8[2048]{0}', space=vmem, size = 0x800, scoped, tag = 'output window, operand 1, single buffered']
    #allocation10 [shape = 's32[1]{0}', space=sflag, size = 0x4, scoped, tag = 'scoped memory for tpu_custom_call.1']
    %11 = vsyncpa [#allocation3], 0
    %12 = vsyncpa [#allocation6], 0
    %13 = vsyncpa [#allocation4], 0
    %14 = vsyncpa [#allocation10], 0
    // Predicated region
    $region2: #{tpu_custom_call.1} parent=1 // pred_check
      _
    $region3: #{tpu_custom_call.1} parent=1 // pred_check_branch
      %16 = sbr.rel (0) target = $region5
    $region4: #{tpu_custom_call.1} parent=1 // pred_region
      %s18 = ssub.s32 256, 256
      %19 = vsyncadd [#allocation3], %s18
      %s20 = sshll.u32 [#allocation2], 4
      %s21 = int_to_ptr.vmem [resolvable:$true] %s20
      %26 = dma.hbm_to_vmem [thread:$0]  %s0, 256, %s21, [#allocation3], 64, 64, 4
    $region5: #{tpu_custom_call.1} parent=1 // pred_fallthru
      _
    // Predicated region
    $region6: #{tpu_custom_call.1} parent=1 // pred_check
      _
    $region7: #{tpu_custom_call.1} parent=1 // pred_check_branch
      %28 = sbr.rel (0) target = $region9
    $region8: #{tpu_custom_call.1} parent=1 // pred_region
      %s30 = ssub.s32 512, 512
      %31 = vsyncadd [#allocation6], %s30
      %s32 = sshll.u32 [#allocation5], 4
      %s33 = int_to_ptr.vmem [resolvable:$true] %s32
      %38 = dma.hbm_to_vmem [thread:$0]  %s1, 512, %s33, [#allocation6], 128, 128, 8
    $region9: #{tpu_custom_call.1} parent=1 // pred_fallthru
      _
    // Predicated region
    $region10: #{tpu_custom_call.1} parent=1 // pred_check
      _
    $region11: #{tpu_custom_call.1} parent=1 // pred_check_branch
      %40 = sbr.rel (0) target = $region13
    $region12: #{tpu_custom_call.1} parent=1 // pred_region
      _
    $region13: #{tpu_custom_call.1} parent=1 // pred_fallthru
      _
    // Predicated region
    $region14: #{tpu_custom_call.1} parent=1 // pred_check
      _
    $region15: #{tpu_custom_call.1} parent=1 // pred_check_branch
      %42 = sbr.rel (0) target = $region17
    $region16: #{tpu_custom_call.1} parent=1 // pred_region
      %s44 = ssub.s32 256, 256
      %45 = vsyncadd [#allocation6], %s44
      %s46 = sshll.u32 [#allocation7], 4
      %s47 = int_to_ptr.vmem [resolvable:$true] %s46
      %52 = dma.hbm_to_vmem [thread:$0]  %s3, 256, %s47, [#allocation6], 64, 64, 4
    $region17: #{tpu_custom_call.1} parent=1 // pred_fallthru
      _
    // Predicated region
    $region18: #{tpu_custom_call.1} parent=1 // pred_check
      _
    $region19: #{tpu_custom_call.1} parent=1 // pred_check_branch
      %54 = sbr.rel (0) target = $region21
    $region20: #{tpu_custom_call.1} parent=1 // pred_region
      %55 = dma.done [#allocation3], 256
    $region21: #{tpu_custom_call.1} parent=1 // pred_fallthru
      _
    // Predicated region
    $region22: #{tpu_custom_call.1} parent=1 // pred_check
      _
    $region23: #{tpu_custom_call.1} parent=1 // pred_check_branch
      %57 = sbr.rel (0) target = $region25
    $region24: #{tpu_custom_call.1} parent=1 // pred_region
      %58 = dma.done [#allocation6], 512
    $region25: #{tpu_custom_call.1} parent=1 // pred_fallthru
      _
    // Predicated region
    $region26: #{tpu_custom_call.1} parent=1 // pred_check
      _
    $region27: #{tpu_custom_call.1} parent=1 // pred_check_branch
      %60 = sbr.rel (0) target = $region29
    $region28: #{tpu_custom_call.1} parent=1 // pred_region
      %61 = dma.done [#allocation6], 256
    $region29: #{tpu_custom_call.1} parent=1 // pred_fallthru
      _
    %v63 = vld [vmem:[#allocation2] sm:$0xf]
    %v64 = vld [vmem:[#allocation2 + $0x4] sm:$0xf]
    %v65 = vld [vmem:[#allocation2 + $0x8] sm:$0xf]
    %v66 = vld [vmem:[#allocation2 + $0xc] sm:$0xf]
    %v67 = vld [vmem:[#allocation5] sm:$0xff]
    %v68 = vld [vmem:[#allocation5 + $0x8] sm:$0xff]
    %v69 = vld [vmem:[#allocation5 + $0x10] sm:$0xff]
    %v70 = vld [vmem:[#allocation5 + $0x18] sm:$0xff]
    %v75 = vunpack.c.l.b16 %v63
    %v76 = vunpack.c.l.b16 %v64
    %v77 = vunpack.c.l.b16 %v65
    %v78 = vunpack.c.l.b16 %v66
    %v79 = vpack.c.b16 %v76, %v75
    %v80 = vpack.c.b16 %v78, %v77
    %v85 = vunpack.c.l.b16 %v67
    %v86 = vunpack.c.h.b16 %v67
    %v87 = vunpack.c.l.b16 %v68
    %v88 = vunpack.c.h.b16 %v68
    %v89 = vunpack.c.l.b16 %v69
    %v90 = vunpack.c.h.b16 %v69
    %v91 = vunpack.c.l.b16 %v70
    %v92 = vunpack.c.h.b16 %v70
    %v93 = vpack.c.b16 %v87, %v85
    %v94 = vpack.c.b16 %v88, %v86
    %v95 = vpack.c.b16 %v91, %v89
    %v96 = vpack.c.b16 %v92, %v90
    %vm101 = vcmask 261120
    %v103 = vsel %vm101, %v79, 0
    %v106 = vsel %vm101, %v80, 0
    %108 = vmatprep.subr.bf16.mxu0 %v94
    %109 = vmatpush1.bf16.msra.mxu0 %v93
    %110 = vmatprep.subr.bf16.mxu0 %v96
    %111 = vmatpush1.bf16.msra.mxu0 %v95
    %112 = vmatprep.subr.bf16.mxu0 0
    %113 = vmatpush1.bf16.msra.mxu0 0
    %114 = vmatprep.subr.bf16.mxu0 0
    %115 = vmatpush1.bf16.msra.mxu0 0
    %116 = vmatprep.subr.bf16.mxu0 0
    %117 = vmatpush1.bf16.msra.mxu0 0
    %118 = vmatprep.subr.bf16.mxu0 0
    %119 = vmatpush1.bf16.msra.mxu0 0
    %120 = vmatprep.subr.bf16.mxu0 0
    %121 = vmatpush1.bf16.msra.mxu0 0
    %122 = vmatprep.subr.bf16.mxu0 0
    %123 = vmatpush1.bf16.msra.mxu0 0
    %124 = vmatprep.subr.bf16.mxu0 0
    %125 = vmatpush1.bf16.msra.mxu0 0
    %126 = vmatprep.subr.bf16.mxu0 0
    %127 = vmatpush1.bf16.msra.mxu0 0
    %128 = vmatprep.subr.bf16.mxu0 0
    %129 = vmatpush1.bf16.msra.mxu0 0
    %130 = vmatprep.subr.bf16.mxu0 0
    %131 = vmatpush1.bf16.msra.mxu0 0
    %132 = vmatprep.subr.bf16.mxu0 0
    %133 = vmatpush1.bf16.msra.mxu0 0
    %134 = vmatprep.subr.bf16.mxu0 0
    %135 = vmatpush1.bf16.msra.mxu0 0
    %136 = vmatprep.subr.bf16.mxu0 0
    %137 = vmatpush1.bf16.msra.mxu0 0
    %138 = vmatprep.subr.bf16.mxu0 0
    %139 = vmatpush1.bf16.msra.mxu0 0
    %140 = vmatprep.mubr.bf16.mxu0 0
    %141 = vmatmul.mubr.bf16.gmra.mrb[0].mxu0 %v103
    %v142 = vpop.f32.mrb[0].mxu0
    %v143 = vadd.f32 0.0, %v142
    %v144 = vpop.f32.mrb[0].mxu0
    %v145 = vadd.f32 0.0, %v144
    %v146 = vpop.f32.mrb[0].mxu0
    %v147 = vadd.f32 0.0, %v146
    %v148 = vpop.f32.mrb[0].mxu0
    %v149 = vadd.f32 0.0, %v148
    %150 = vmatprep.mubr.bf16.mxu0 0
    %151 = vmatmul.mubr.bf16.gmra.mrb[0].mxu0 %v106
    %v152 = vpop.f32.mrb[0].mxu0
    %v153 = vadd.f32 0.0, %v152
    %v154 = vpop.f32.mrb[0].mxu0
    %v155 = vadd.f32 0.0, %v154
    %v156 = vpop.f32.mrb[0].mxu0
    %v157 = vadd.f32 0.0, %v156
    %v158 = vpop.f32.mrb[0].mxu0
    %v159 = vadd.f32 0.0, %v158
    %160 = vdwg.mxu0
    %v161 = vld [vmem:[%s2] sm:$0x3]
    %v163 = vlaneseq
    %v164 = vshrl.u32 %v163, 7
    %v165 = vsub.s32 0, %v164
    %v166 = vrot.slane %v161, %v165
    %v167 = vlaneseq
    %v168 = vshrl.u32 %v167, 7
    %v169 = vsub.s32 1, %v168
    %v170 = vrot.slane %v161, %v169
    %v173 = vadd.f32 %v143, %v166
    %v174 = vadd.f32 %v145, %v170
    %v175 = vadd.f32 %v147, %v166
    %v176 = vadd.f32 %v149, %v170
    %v177 = vadd.f32 %v153, %v166
    %v178 = vadd.f32 %v155, %v170
    %v179 = vadd.f32 %v157, %v166
    %v180 = vadd.f32 %v159, %v170
    %v181 = vpack.c.bf16 %v175, %v173
    %v182 = vpack.c.bf16 %v176, %v174
    %v183 = vpack.c.bf16 %v179, %v177
    %v184 = vpack.c.bf16 %v180, %v178
    %v189 = vunpack.c.l.b16 %v181
    %v190 = vunpack.c.l.b16 %v182
    %v191 = vunpack.c.h.b16 %v181
    %v192 = vunpack.c.h.b16 %v182
    %v193 = vunpack.c.l.b16 %v183
    %v194 = vunpack.c.l.b16 %v184
    %v195 = vunpack.c.h.b16 %v183
    %v196 = vunpack.c.h.b16 %v184
    %v197 = vpack.c.b16 %v190, %v189
    %v198 = vpack.c.b16 %v192, %v191
    %v199 = vpack.c.b16 %v194, %v193
    %v200 = vpack.c.b16 %v196, %v195
    %205 = vst [vmem:[#allocation8] sm:$0xff] %v197
    %206 = vst [vmem:[#allocation8 + $0x8] sm:$0xff] %v198
    %207 = vst [vmem:[#allocation8 + $0x10] sm:$0xff] %v199
    %208 = vst [vmem:[#allocation8 + $0x18] sm:$0xff] %v200
    %v209 = vld [vmem:[#allocation7] sm:$0xf]
    %v210 = vld [vmem:[#allocation7 + $0x4] sm:$0xf]
    %v211 = vld [vmem:[#allocation7 + $0x8] sm:$0xf]
    %v212 = vld [vmem:[#allocation7 + $0xc] sm:$0xf]
    %v213 = vunpack.c.l.bf16 %v209
    %v214 = vunpack.c.l.bf16 %v210
    %v215 = vunpack.c.l.bf16 %v211
    %v216 = vunpack.c.l.bf16 %v212
    %218 = vset.pattern.permute.xlu0 0
    %219 = vperm.xlu0 %218, %v213
    %v220 = vpop.permute.xlu0 %219
    %223 = vset.pattern.permute.xlu0 0
    %224 = vperm.xlu0 %223, %v214
    %v225 = vpop.permute.xlu0 %224
    %228 = vset.pattern.permute.xlu0 0
    %229 = vperm.xlu0 %228, %v215
    %v230 = vpop.permute.xlu0 %229
    %233 = vset.pattern.permute.xlu0 0
    %234 = vperm.xlu0 %233, %v216
    %v235 = vpop.permute.xlu0 %234
    %v237 = vadd.f32 %v173, %v220
    %v238 = vadd.f32 %v174, %v220
    %v239 = vadd.f32 %v175, %v225
    %v240 = vadd.f32 %v176, %v225
    %v241 = vadd.f32 %v177, %v230
    %v242 = vadd.f32 %v178, %v230
    %v243 = vadd.f32 %v179, %v235
    %v244 = vadd.f32 %v180, %v235
    %v245 = vmax.f32 %v237, %v239
    %v246 = vrot.slane %v245, 4
    %v247 = vmax.f32 %v245, %v246
    %v248 = vrot.slane %v247, 2
    %v249 = vmax.f32 %v247, %v248
    %v250 = vrot.slane %v249, 1
    %v251 = vmax.f32 %v249, %v250
    %v252 = vmax.f32 %v238, %v240
    %v253 = vrot.slane %v252, 4
    %v254 = vmax.f32 %v252, %v253
    %v255 = vrot.slane %v254, 2
    %v256 = vmax.f32 %v254, %v255
    %v257 = vrot.slane %v256, 1
    %v258 = vmax.f32 %v256, %v257
    %v259 = vmax.f32 %v241, %v243
    %v260 = vrot.slane %v259, 4
    %v261 = vmax.f32 %v259, %v260
    %v262 = vrot.slane %v261, 2
    %v263 = vmax.f32 %v261, %v262
    %v264 = vrot.slane %v263, 1
    %v265 = vmax.f32 %v263, %v264
    %v266 = vmax.f32 %v242, %v244
    %v267 = vrot.slane %v266, 4
    %v268 = vmax.f32 %v266, %v267
    %v269 = vrot.slane %v268, 2
    %v270 = vmax.f32 %v268, %v269
    %v271 = vrot.slane %v270, 1
    %v272 = vmax.f32 %v270, %v271
    %v273 = vmax.f32 %v251, 0.0
    %v274 = vmax.f32 %v258, 0.0
    %v275 = vmax.f32 %v265, 0.0
    %v276 = vmax.f32 %v272, 0.0
    %v277 = vadd.f32 %v273, 1.0
    %v278 = vlog2.pop %v277
    %v279 = vmul.f32 %v278, 0.6931472
    %v280 = vmul.f32 -0.5, %v273
    %v281 = vadd.f32 %v280, 1.0
    %v282 = vmul.f32 %v281, %v273
    %v283 = vand.u32 2147483647, %v273
    %vm284 = vcmp.lt.f32.partialorder %v283, 0.0004427343
    %v285 = vsel %vm284, %v282, %v279
    %v286 = vadd.f32 %v274, 1.0
    %v287 = vlog2.pop %v286
    %v288 = vmul.f32 %v287, 0.6931472
    %v289 = vmul.f32 -0.5, %v274
    %v290 = vadd.f32 %v289, 1.0
    %v291 = vmul.f32 %v290, %v274
    %v292 = vand.u32 2147483647, %v274
    %vm293 = vcmp.lt.f32.partialorder %v292, 0.0004427343
    %v294 = vsel %vm293, %v291, %v288
    %v295 = vadd.f32 %v275, 1.0
    %v296 = vlog2.pop %v295
    %v297 = vmul.f32 %v296, 0.6931472
    %v298 = vmul.f32 -0.5, %v275
    %v299 = vadd.f32 %v298, 1.0
    %v300 = vmul.f32 %v299, %v275
    %v301 = vand.u32 2147483647, %v275
    %vm302 = vcmp.lt.f32.partialorder %v301, 0.0004427343
    %v303 = vsel %vm302, %v300, %v297
    %v304 = vadd.f32 %v276, 1.0
    %v305 = vlog2.pop %v304
    %v306 = vmul.f32 %v305, 0.6931472
    %v307 = vmul.f32 -0.5, %v276
    %v308 = vadd.f32 %v307, 1.0
    %v309 = vmul.f32 %v308, %v276
    %v310 = vand.u32 2147483647, %v276
    %vm311 = vcmp.lt.f32.partialorder %v310, 0.0004427343
    %v312 = vsel %vm311, %v309, %v306
    %v317 = vcombine.low %v285, %v294
    %v319 = vunpack.c.l.s4 1966171168
    %v320 = vunpack.c.0.s8 %v319
    %v321 = vlaneseq
    %v322 = vshrl.u32 %v321, 7
    %v323 = vsub.s32 %v320, %v322
    %v324 = vrot.slane %v317, %v323
    %v326 = vunpack.c.l.s4 1966171168
    %v327 = vunpack.c.0.s8 %v326
    %v328 = vlaneseq
    %v329 = vshrl.u32 %v328, 7
    %v330 = vsub.s32 %v327, %v329
    %v331 = vrot.slane %v324, %v330
    %v332 = vcombine.low %v303, %v312
    %v334 = vunpack.c.l.s4 1966171168
    %v335 = vunpack.c.0.s8 %v334
    %v336 = vlaneseq
    %v337 = vshrl.u32 %v336, 7
    %v338 = vsub.s32 %v335, %v337
    %v339 = vrot.slane %v332, %v338
    %v341 = vunpack.c.l.s4 1966171168
    %v342 = vunpack.c.0.s8 %v341
    %v343 = vlaneseq
    %v344 = vshrl.u32 %v343, 7
    %v345 = vsub.s32 %v342, %v344
    %v346 = vrot.slane %v339, %v345
    %v349 = vlaneseq
    %vm350 = vcmp.ge.s32.totalorder %v349, 0
    %vm351 = vcmp.lt.s32.totalorder %v349, 256
    %vm352 = vmand %vm350, %vm351
    %353 = vst.msk [vmem:[#allocation9] sm:$0x3] %vm352, %v331
    %354 = vst.msk [vmem:[#allocation9 + $0x2] sm:$0x3] %vm352, %v346
    // Predicated region
    $region30: #{tpu_custom_call.1} parent=1 // pred_check
      _
    $region31: #{tpu_custom_call.1} parent=1 // pred_check_branch
      %356 = sbr.rel (0) target = $region33
    $region32: #{tpu_custom_call.1} parent=1 // pred_region
      %s358 = ssub.s32 512, 512
      %359 = vsyncadd [#allocation4], %s358
      %s360 = sshll.u32 [#allocation8], 4
      %s361 = int_to_ptr.vmem [resolvable:$true] %s360
      %366 = dma.vmem_to_hbm [thread:$0]  %s361, 512, %s4, [#allocation4], 128, 128, 8
    $region33: #{tpu_custom_call.1} parent=1 // pred_fallthru
      _
    // Predicated region
    $region34: #{tpu_custom_call.1} parent=1 // pred_check
      _
    $region35: #{tpu_custom_call.1} parent=1 // pred_check_branch
      %368 = sbr.rel (0) target = $region37
    $region36: #{tpu_custom_call.1} parent=1 // pred_region
      %s370 = ssub.s32 64, 64
      %371 = vsyncadd [#allocation10], %s370
      %s372 = sshll.u32 [#allocation9], 4
      %s373 = int_to_ptr.vmem [resolvable:$true] %s372
      %378 = dma.vmem_to_hbm [thread:$0]  %s373, 64, %s5, [#allocation10], 32, 32, 2
    $region37: #{tpu_custom_call.1} parent=1 // pred_fallthru
      _
    // Predicated region
    $region38: #{tpu_custom_call.1} parent=1 // pred_check
      _
    $region39: #{tpu_custom_call.1} parent=1 // pred_check_branch
      %380 = sbr.rel (0) target = $region41
    $region40: #{tpu_custom_call.1} parent=1 // pred_region
      %381 = dma.done [#allocation4], 512
    $region41: #{tpu_custom_call.1} parent=1 // pred_fallthru
      _
    // Predicated region
    $region42: #{tpu_custom_call.1} parent=1 // pred_check
      _
    $region43: #{tpu_custom_call.1} parent=1 // pred_check_branch
      %383 = sbr.rel (0) target = $region45
    $region44: #{tpu_custom_call.1} parent=1 // pred_region
      %384 = dma.done [#allocation10], 64
    $region45: #{tpu_custom_call.1} parent=1 // pred_fallthru
      _
    %385 = vsyncpa [#allocation3], 1
    %386 = vsyncpa [#allocation6], 1
    %387 = vsyncpa [#allocation4], 1
    %388 = vsyncpa [#allocation10], 1

</llo_original>
